<compile_context>
chip_gen: v6e
topology: v6e:2x2x1
jax: 0.10.0
libtpu: 0.0.40
codegen_flags: <defaults>
</compile_context>

<pallas_src>
import jax
import jax.numpy as jnp
from jax.experimental import pallas as pl
from jax.experimental.pallas import tpu as pltpu


LANE = 128
MAX_TILE_ROWS = 4096   # (4096, 128) f32 block = 2 MiB per input per buffer
NUM_SLICES = 2         # parallel split for v7x dual TensorCore


def _cdiv(a, b):
    return -(-a // b)


def _round_up(a, m):
    return _cdiv(a, m) * m


# ----------------------------- Pallas kernel ---------------------------------

def _make_reduction_kernel(n_valid, tile_rows, steps):
    """Kernel accumulating lane-wise partial sums of [p*t, p, t, bce]."""

    def kernel(x_ref, t_ref, acc_ref):
        c = pl.program_id(0)   # parallel slice
        i = pl.program_id(1)   # reduction step within the slice

        @pl.when(i == 0)
        def _init():
            acc_ref[...] = jnp.zeros_like(acc_ref)

        x = x_ref[...].astype(jnp.float32)
        t = t_ref[...].astype(jnp.float32)

        # Mask out elements past the true element count (ragged tail and
        # grid-overhang blocks). NOTE: int32 index math => n must be < 2^31.
        base_row = (c * steps + i) * tile_rows
        row = jax.lax.broadcasted_iota(jnp.int32, x.shape, 0)
        lane = jax.lax.broadcasted_iota(jnp.int32, x.shape, 1)
        valid = (base_row + row) * LANE + lane < n_valid

        # sigmoid + BCE-with-logits sharing a single exp:
        #   e = exp(-|x|);  sigmoid(x) = 1/(1+e)   (x >= 0)
        #                             = e/(1+e)    (x <  0)
        #   bce = max(x,0) - x*t + log1p(e)
        e = jnp.exp(-jnp.abs(x))
        r = pl.reciprocal(1.0 + e, approx=True)    # EUP slot, near-free
        p = jnp.where(x >= 0, r, e * r)
        bce = jnp.maximum(x, 0.0) - x * t + jnp.log1p(e)

        zero = jnp.float32(0.0)
        pt = jnp.where(valid, p * t, zero)
        ps = jnp.where(valid, p, zero)
        ts = jnp.where(valid, t, zero)
        bs = jnp.where(valid, bce, zero)

        # Partial-reduce (tile_rows, 128) -> (8, 128): summing over the leading
        # axis is just vreg-wise VALU adds; cross-lane/sublane reduction is
        # deferred to the tiny wrapper-side epilogue.
        g = tile_rows // 8
        acc_ref[0] += pt.reshape(g, 8, LANE).sum(axis=0)
        acc_ref[1] += ps.reshape(g, 8, LANE).sum(axis=0)
        acc_ref[2] += ts.reshape(g, 8, LANE).sum(axis=0)
        acc_ref[3] += bs.reshape(g, 8, LANE).sum(axis=0)

    return kernel


def _partial_sums(x2d, t2d, n_valid):
    R, L = x2d.shape
    assert L == LANE
    rows_per_slice = _cdiv(R, NUM_SLICES)
    tile_rows = min(MAX_TILE_ROWS, _round_up(rows_per_slice, 8))
    steps = _cdiv(rows_per_slice, tile_rows)

    kernel = _make_reduction_kernel(n_valid, tile_rows, steps)

    return pl.pallas_call(
        kernel,
        out_shape=jax.ShapeDtypeStruct((NUM_SLICES, 4, 8, LANE), jnp.float32),
        grid_spec=pltpu.PrefetchScalarGridSpec(
            num_scalar_prefetch=0,
            grid=(NUM_SLICES, steps),
            in_specs=[
                # If DMA is still exposed at large tiles, bump with
                # pipeline_mode=pl.Buffered(3) (VMEM budget permitting).
                pl.BlockSpec((tile_rows, LANE), lambda c, i: (c * steps + i, 0)),
                pl.BlockSpec((tile_rows, LANE), lambda c, i: (c * steps + i, 0)),
            ],
            # One resident (4, 8, 128) accumulator block per parallel slice;
            # it stays in VMEM across the "arbitrary" axis and is written back
            # to HBM once per slice.
            out_specs=pl.BlockSpec((None, 4, 8, LANE), lambda c, i: (c, 0, 0, 0)),
        ),
        compiler_params=pltpu.CompilerParams(
            dimension_semantics=("parallel", "arbitrary")),
    )(x2d, t2d)


# ------------------------------ Python wrapper --------------------------------

def combined_loss(inputs, targets, alpha=0.5, beta=0.3, gamma=0.2,
                  tversky_alpha=0.7, tversky_beta=0.3,
                  focal_alpha=0.8, focal_gamma=2.0, smooth=1.0):
    """Pallas implementation of CombinedLoss.forward (inputs are raw logits)."""
    x = inputs.reshape(-1)     # keep native dtype; kernel casts to f32 in VMEM
    t = targets.reshape(-1)
    n = x.shape[0]

    # Only pad to a multiple of 128 lanes when the element count is ragged;
    # the in-kernel mask makes the pad values irrelevant.
    pad = (-n) % LANE
    if pad:
        # TODO(synk): this rare-path concatenate still copies; a 1-D BlockSpec
        # would avoid it entirely, at the cost of a less lane-friendly layout.
        x = jnp.concatenate([x, jnp.zeros((pad,), x.dtype)])
        t = jnp.concatenate([t, jnp.zeros((pad,), t.dtype)])
    x2d = x.reshape(-1, LANE)
    t2d = t.reshape(-1, LANE)

    acc = _partial_sums(x2d, t2d, n)          # (NUM_SLICES, 4, 8, 128)
    sums = jnp.sum(acc, axis=(0, 2, 3))       # tiny epilogue reduction -> (4,)
    sum_pt, sum_p, sum_t, sum_bce = sums[0], sums[1], sums[2], sums[3]

    # --- Tversky loss (on sigmoid(inputs)) ---
    tp = sum_pt
    fp = sum_p - sum_pt            # sum((1 - t) * p)
    fn = sum_t - sum_pt            # sum(t * (1 - p))
    tversky = (tp + smooth) / (tp + tversky_alpha * fp + tversky_beta * fn + smooth)
    tversky_loss = 1.0 - tversky

    # --- Dice loss (CombinedLoss passes sigmoid(inputs) to dice) ---
    dice = (2.0 * sum_pt + smooth) / (sum_p + sum_t + smooth)
    dice_loss = 1.0 - dice

    # --- Focal loss ---
    bce_mean = sum_bce / jnp.float32(n)
    focal_loss = focal_alpha * (1.0 - jnp.exp(-bce_mean)) ** focal_gamma * bce_mean

    return alpha * tversky_loss + beta * dice_loss + gamma * focal_loss


# Pure-JAX reference for sanity checking.
def _combined_loss_ref(inputs, targets, alpha=0.5, beta=0.3, gamma=0.2):
    x = inputs.astype(jnp.float32).reshape(-1)
    t = targets.astype(jnp.float32).reshape(-1)
    p = jax.nn.sigmoid(x)
    smooth = 1.0
    tp = jnp.sum(p * t)
    fp = jnp.sum((1.0 - t) * p)
    fn = jnp.sum(t * (1.0 - p))
    tversky_loss = 1.0 - (tp + smooth) / (tp + 0.7 * fp + 0.3 * fn + smooth)
    dice_loss = 1.0 - (2.0 * tp + smooth) / (jnp.sum(p) + jnp.sum(t) + smooth)
    bce = jnp.mean(jnp.maximum(x, 0.0) - x * t + jnp.log1p(jnp.exp(-jnp.abs(x))))
    focal = 0.8 * (1.0 - jnp.exp(-bce)) ** 2.0 * bce
    return alpha * tversky_loss + beta * dice_loss + gamma * focal


if __name__ == "__main__":
    key = jax.random.PRNGKey(0)
    k1, k2 = jax.random.split(key)
    B, C, H, W = 2, 4, 16, 16
    inputs = jax.random.normal(k1, (B, C, H, W), dtype=jnp.float32)            # logits
    targets = jax.random.bernoulli(k2, 0.3, (B, C, H, W)).astype(jnp.float32)  # binary mask

    out = jax.block_until_ready(combined_loss(inputs, targets))
    ref = jax.block_until_ready(_combined_loss_ref(inputs, targets))
    # Tolerance allows for the approx-reciprocal sigmoid inside the kernel.
    assert jnp.allclose(out, ref, atol=1e-3, rtol=1e-3), (out, ref)
    print("KERNEL_OK")
</pallas_src>

<mosaic_0001>
module attributes {stable_mosaic.version = 11 : i64} {
  func.func @kernel(%arg0: i32, %arg1: i32, %arg2: memref<8x128xf32, #tpu.memory_space<vmem>>, %arg3: memref<8x128xf32, #tpu.memory_space<vmem>>, %arg4: memref<1x4x8x128xf32, #tpu.memory_space<vmem>>) attributes {dimension_semantics = [#tpu.dimension_semantics<parallel>, #tpu.dimension_semantics<arbitrary>], iteration_bounds = array<i64: 2, 1>, scalar_prefetch = 0 : i64, scratch_operands = 0 : i64, tpu.core_type = #tpu.core_type<tc>, window_params = [{transform_indices = @transform_0, window_bounds = array<i64: 8, 128>}, {transform_indices = @transform_1, window_bounds = array<i64: 8, 128>}, {transform_indices = @transform_2, window_bounds = array<i64: 1, 4, 8, 128>}]} {
    %c0_i32 = arith.constant 0 : i32
    %0 = arith.cmpi eq, %arg1, %c0_i32 : i32
    %1 = arith.extui %0 : i1 to i32
    %c0_i32_0 = arith.constant 0 : i32
    %2 = arith.cmpi ne, %1, %c0_i32_0 : i32
    scf.if %2 {
      %cst_44 = arith.constant 0.000000e+00 : f32
      %75 = vector.broadcast %cst_44 : f32 to vector<4x8x128xf32>
      %c0_45 = arith.constant 0 : index
      %c0_46 = arith.constant 0 : index
      %c0_47 = arith.constant 0 : index
      %c0_48 = arith.constant 0 : index
      %76 = vector.load %arg4[%c0_45, %c0_46, %c0_47, %c0_48] : memref<1x4x8x128xf32, #tpu.memory_space<vmem>>, vector<1x4x8x128xf32>
      %77 = vector.shape_cast %76 : vector<1x4x8x128xf32> to vector<4x8x128xf32>
      %78 = vector.shape_cast %75 : vector<4x8x128xf32> to vector<1x4x8x128xf32>
      tpu.vector_store %arg4[%c0_45, %c0_46, %c0_47, %c0_48], %78 {strides = array<i32>} : memref<1x4x8x128xf32, #tpu.memory_space<vmem>>, vector<1x4x8x128xf32>,
    } else {
    }
    %c0 = arith.constant 0 : index
    %c0_1 = arith.constant 0 : index
    %3 = vector.load %arg2[%c0, %c0_1] : memref<8x128xf32, #tpu.memory_space<vmem>>, vector<8x128xf32>
    %c0_2 = arith.constant 0 : index
    %c0_3 = arith.constant 0 : index
    %4 = vector.load %arg3[%c0_2, %c0_3] : memref<8x128xf32, #tpu.memory_space<vmem>>, vector<8x128xf32>
    %c1_i32 = arith.constant 1 : i32
    %5 = arith.muli %arg0, %c1_i32 : i32
    %6 = arith.addi %5, %arg1 : i32
    %c8_i32 = arith.constant 8 : i32
    %7 = arith.muli %6, %c8_i32 : i32
    %8 = tpu.iota {dimensions = array<i32: 0>} : vector<8x128xi32>
    %9 = tpu.iota {dimensions = array<i32: 1>} : vector<8x128xi32>
    %10 = vector.broadcast %7 : i32 to vector<8x128xi32>
    %11 = arith.addi %10, %8 : vector<8x128xi32>
    %c128_i32 = arith.constant 128 : i32
    %12 = vector.broadcast %c128_i32 : i32 to vector<8x128xi32>
    %13 = arith.muli %11, %12 : vector<8x128xi32>
    %14 = arith.addi %13, %9 : vector<8x128xi32>
    %c2048_i32 = arith.constant 2048 : i32
    %15 = vector.broadcast %c2048_i32 : i32 to vector<8x128xi32>
    %16 = arith.cmpi slt, %14, %15 : vector<8x128xi32>
    %17 = math.absf %3 : vector<8x128xf32>
    %cst = arith.constant 0.000000e+00 : f32
    %18 = vector.broadcast %cst : f32 to vector<8x128xf32>
    %19 = arith.subf %18, %17 : vector<8x128xf32>
    %20 = math.exp %19 : vector<8x128xf32>
    %cst_4 = arith.constant 1.000000e+00 : f32
    %21 = vector.broadcast %cst_4 : f32 to vector<8x128xf32>
    %22 = arith.addf %21, %20 : vector<8x128xf32>
    %23 = tpu.reciprocal %22 {approx = true} : vector<8x128xf32> -> vector<8x128xf32>
    %cst_5 = arith.constant 0.000000e+00 : f32
    %24 = vector.broadcast %cst_5 : f32 to vector<8x128xf32>
    %25 = arith.cmpf oge, %3, %24 : vector<8x128xf32>
    %26 = arith.mulf %20, %23 : vector<8x128xf32>
    %27 = arith.select %25, %23, %26 : vector<8x128xi1>, vector<8x128xf32>
    %cst_6 = arith.constant 0.000000e+00 : f32
    %28 = vector.broadcast %cst_6 : f32 to vector<8x128xf32>
    %29 = arith.maximumf %3, %28 : vector<8x128xf32>
    %30 = arith.mulf %3, %4 : vector<8x128xf32>
    %31 = arith.subf %29, %30 : vector<8x128xf32>
    %32 = math.log1p %20 : vector<8x128xf32>
    %33 = arith.addf %31, %32 : vector<8x128xf32>
    %34 = arith.mulf %27, %4 : vector<8x128xf32>
    %cst_7 = arith.constant 0.000000e+00 : f32
    %35 = vector.broadcast %cst_7 : f32 to vector<8x128xf32>
    %36 = arith.select %16, %34, %35 : vector<8x128xi1>, vector<8x128xf32>
    %cst_8 = arith.constant 0.000000e+00 : f32
    %37 = vector.broadcast %cst_8 : f32 to vector<8x128xf32>
    %38 = arith.select %16, %27, %37 : vector<8x128xi1>, vector<8x128xf32>
    %cst_9 = arith.constant 0.000000e+00 : f32
    %39 = vector.broadcast %cst_9 : f32 to vector<8x128xf32>
    %40 = arith.select %16, %4, %39 : vector<8x128xi1>, vector<8x128xf32>
    %cst_10 = arith.constant 0.000000e+00 : f32
    %41 = vector.broadcast %cst_10 : f32 to vector<8x128xf32>
    %42 = arith.select %16, %33, %41 : vector<8x128xi1>, vector<8x128xf32>
    %c0_11 = arith.constant 0 : index
    %c0_12 = arith.constant 0 : index
    %c0_13 = arith.constant 0 : index
    %c0_14 = arith.constant 0 : index
    %43 = vector.load %arg4[%c0_11, %c0_12, %c0_13, %c0_14] : memref<1x4x8x128xf32, #tpu.memory_space<vmem>>, vector<1x1x8x128xf32>
    %44 = vector.shape_cast %43 : vector<1x1x8x128xf32> to vector<8x128xf32>
    %45 = vector.shape_cast %36 : vector<8x128xf32> to vector<1x8x128xf32>
    %cst_15 = arith.constant dense<0.000000e+00> : vector<8x128xf32>
    %46 = vector.multi_reduction <add>, %45, %cst_15 [0] : vector<1x8x128xf32> to vector<8x128xf32>
    %47 = arith.addf %44, %46 : vector<8x128xf32>
    %c0_16 = arith.constant 0 : index
    %c0_17 = arith.constant 0 : index
    %c0_18 = arith.constant 0 : index
    %c0_19 = arith.constant 0 : index
    %48 = vector.load %arg4[%c0_16, %c0_17, %c0_18, %c0_19] : memref<1x4x8x128xf32, #tpu.memory_space<vmem>>, vector<1x1x8x128xf32>
    %49 = vector.shape_cast %48 : vector<1x1x8x128xf32> to vector<8x128xf32>
    %50 = vector.shape_cast %47 : vector<8x128xf32> to vector<1x1x8x128xf32>
    tpu.vector_store %arg4[%c0_16, %c0_17, %c0_18, %c0_19], %50 {strides = array<i32>} : memref<1x4x8x128xf32, #tpu.memory_space<vmem>>, vector<1x1x8x128xf32>,
    %c0_20 = arith.constant 0 : index
    %c1 = arith.constant 1 : index
    %c0_21 = arith.constant 0 : index
    %c0_22 = arith.constant 0 : index
    %51 = vector.load %arg4[%c0_20, %c1, %c0_21, %c0_22] : memref<1x4x8x128xf32, #tpu.memory_space<vmem>>, vector<1x1x8x128xf32>
    %52 = vector.shape_cast %51 : vector<1x1x8x128xf32> to vector<8x128xf32>
    %53 = vector.shape_cast %38 : vector<8x128xf32> to vector<1x8x128xf32>
    %cst_23 = arith.constant dense<0.000000e+00> : vector<8x128xf32>
    %54 = vector.multi_reduction <add>, %53, %cst_23 [0] : vector<1x8x128xf32> to vector<8x128xf32>
    %55 = arith.addf %52, %54 : vector<8x128xf32>
    %c0_24 = arith.constant 0 : index
    %c1_25 = arith.constant 1 : index
    %c0_26 = arith.constant 0 : index
    %c0_27 = arith.constant 0 : index
    %56 = vector.load %arg4[%c0_24, %c1_25, %c0_26, %c0_27] : memref<1x4x8x128xf32, #tpu.memory_space<vmem>>, vector<1x1x8x128xf32>
    %57 = vector.shape_cast %56 : vector<1x1x8x128xf32> to vector<8x128xf32>
    %58 = vector.shape_cast %55 : vector<8x128xf32> to vector<1x1x8x128xf32>
    tpu.vector_store %arg4[%c0_24, %c1_25, %c0_26, %c0_27], %58 {strides = array<i32>} : memref<1x4x8x128xf32, #tpu.memory_space<vmem>>, vector<1x1x8x128xf32>,
    %c0_28 = arith.constant 0 : index
    %c2 = arith.constant 2 : index
    %c0_29 = arith.constant 0 : index
    %c0_30 = arith.constant 0 : index
    %59 = vector.load %arg4[%c0_28, %c2, %c0_29, %c0_30] : memref<1x4x8x128xf32, #tpu.memory_space<vmem>>, vector<1x1x8x128xf32>
    %60 = vector.shape_cast %59 : vector<1x1x8x128xf32> to vector<8x128xf32>
    %61 = vector.shape_cast %40 : vector<8x128xf32> to vector<1x8x128xf32>
    %cst_31 = arith.constant dense<0.000000e+00> : vector<8x128xf32>
    %62 = vector.multi_reduction <add>, %61, %cst_31 [0] : vector<1x8x128xf32> to vector<8x128xf32>
    %63 = arith.addf %60, %62 : vector<8x128xf32>
    %c0_32 = arith.constant 0 : index
    %c2_33 = arith.constant 2 : index
    %c0_34 = arith.constant 0 : index
    %c0_35 = arith.constant 0 : index
    %64 = vector.load %arg4[%c0_32, %c2_33, %c0_34, %c0_35] : memref<1x4x8x128xf32, #tpu.memory_space<vmem>>, vector<1x1x8x128xf32>
    %65 = vector.shape_cast %64 : vector<1x1x8x128xf32> to vector<8x128xf32>
    %66 = vector.shape_cast %63 : vector<8x128xf32> to vector<1x1x8x128xf32>
    tpu.vector_store %arg4[%c0_32, %c2_33, %c0_34, %c0_35], %66 {strides = array<i32>} : memref<1x4x8x128xf32, #tpu.memory_space<vmem>>, vector<1x1x8x128xf32>,
    %c0_36 = arith.constant 0 : index
    %c3 = arith.constant 3 : index
    %c0_37 = arith.constant 0 : index
    %c0_38 = arith.constant 0 : index
    %67 = vector.load %arg4[%c0_36, %c3, %c0_37, %c0_38] : memref<1x4x8x128xf32, #tpu.memory_space<vmem>>, vector<1x1x8x128xf32>
    %68 = vector.shape_cast %67 : vector<1x1x8x128xf32> to vector<8x128xf32>
    %69 = vector.shape_cast %42 : vector<8x128xf32> to vector<1x8x128xf32>
    %cst_39 = arith.constant dense<0.000000e+00> : vector<8x128xf32>
    %70 = vector.multi_reduction <add>, %69, %cst_39 [0] : vector<1x8x128xf32> to vector<8x128xf32>
    %71 = arith.addf %68, %70 : vector<8x128xf32>
    %c0_40 = arith.constant 0 : index
    %c3_41 = arith.constant 3 : index
    %c0_42 = arith.constant 0 : index
    %c0_43 = arith.constant 0 : index
    %72 = vector.load %arg4[%c0_40, %c3_41, %c0_42, %c0_43] : memref<1x4x8x128xf32, #tpu.memory_space<vmem>>, vector<1x1x8x128xf32>
    %73 = vector.shape_cast %72 : vector<1x1x8x128xf32> to vector<8x128xf32>
    %74 = vector.shape_cast %71 : vector<8x128xf32> to vector<1x1x8x128xf32>
    tpu.vector_store %arg4[%c0_40, %c3_41, %c0_42, %c0_43], %74 {strides = array<i32>} : memref<1x4x8x128xf32, #tpu.memory_space<vmem>>, vector<1x1x8x128xf32>,
    return
  }
  func.func @transform_0(%arg0: i32, %arg1: i32) -> (i32, i32) {
    %c1_i32 = arith.constant 1 : i32
    %0 = arith.muli %arg0, %c1_i32 : i32
    %1 = arith.addi %0, %arg1 : i32
    %c0_i32 = arith.constant 0 : i32
    %c0_i32_0 = arith.constant 0 : i32
    return %1, %c0_i32 : i32, i32
  }
  func.func @transform_1(%arg0: i32, %arg1: i32) -> (i32, i32) {
    %c1_i32 = arith.constant 1 : i32
    %0 = arith.muli %arg0, %c1_i32 : i32
    %1 = arith.addi %0, %arg1 : i32
    %c0_i32 = arith.constant 0 : i32
    %c0_i32_0 = arith.constant 0 : i32
    return %1, %c0_i32 : i32, i32
  }
  func.func @transform_2(%arg0: i32, %arg1: i32) -> (i32, i32, i32, i32) {
    %c0_i32 = arith.constant 0 : i32
    %c0_i32_0 = arith.constant 0 : i32
    %c0_i32_1 = arith.constant 0 : i32
    %c0_i32_2 = arith.constant 0 : i32
    return %arg0, %c0_i32, %c0_i32_0, %c0_i32_1 : i32, i32, i32, i32
  }
}

</mosaic_0001>

<llo_original>
// kernel: tpu_custom_call.1
$region0: #{tpu_custom_call.1}
  #allocation0 [shape = 'u32[]', space=smem, size = 0x4, offset = 0x4, fixed_abs, tag = 'smem constant byte address 0x4 - core index']
  #allocation1 [shape = 'u32[144,128]{1,0:T(1,128)}', space=vmem, size = 0x12000, scoped, tag = 'internal scratch']
  %s0 = inlined_call_operand.hbm [shape: f32[16,128], index: 0, kind: input, shape index: {}]
  %s1 = inlined_call_operand.hbm [shape: f32[16,128], index: 1, kind: input, shape index: {}]
  %s2 = inlined_call_operand.hbm [shape: f32[2,4,8,128], index: 2, kind: output, shape index: {}]
  %s3 = sld [smem:[#allocation0]]
  $region53: #{tpu_custom_call.1} parent=0
    _
  %s5 = ssub.s32 1, %s3
  %s6 = scalar_select 0, %s5, %s3
  $region1: #{tpu_custom_call.1} parent=0
    #allocation2 [shape = 'u8[8192]{0}', space=vmem, size = 0x2000, scoped, tag = 'input window, operand 0']
    #allocation3 [shape = 's32[2]{0}', space=sflag, size = 0x8, scoped, tag = 'scoped memory for tpu_custom_call.1']
    #allocation4 [shape = 's32[2]{0}', space=sflag, size = 0x8, scoped, tag = 'scoped memory for tpu_custom_call.1']
    #allocation5 [shape = 'u8[8192]{0}', space=vmem, size = 0x2000, scoped, tag = 'input window, operand 1']
    #allocation6 [shape = 's32[2]{0}', space=sflag, size = 0x8, scoped, tag = 'scoped memory for tpu_custom_call.1']
    #allocation7 [shape = 'u8[32768]{0}', space=vmem, size = 0x8000, scoped, tag = 'output window, operand 0']
    %7 = vsyncpa [#allocation3], 0
    %s8 = scalar_lea.sflag [#allocation3], 1
    %9 = vsyncpa %s8, 0
    %10 = vsyncpa [#allocation6], 0
    %s11 = scalar_lea.sflag [#allocation6], 1
    %12 = vsyncpa %s11, 0
    %13 = vsyncpa [#allocation4], 0
    %s14 = scalar_lea.sflag [#allocation4], 1
    %15 = vsyncpa %s14, 0
    loop: start=0, step=1, limit=4
    $region2: #{tpu_custom_call.1} parent=1 // loop_pre_header
      _
    $region3: #{tpu_custom_call.1} parent=1 // loop_header
      %s17 = sphi 0, %s21
      %p18 = scmp.ge.s32.totalorder %s17, 4
      %s24 = sphi 0, %s36
      %s25 = sphi 0, %s32
      %s26 = sphi 0, %s24
      %s27 = sphi 0, %s25
      %s28 = sphi 0, %s26
      %s29 = sphi 0, %s27
      %s41 = sphi 0, %s43
      %s44 = sphi 0, %s41
      %s45 = sphi 0, %s44
      %s61 = sphi 0, %s45
      %s69 = sphi 0, %s71
      %s72 = sphi 0, %s69
      %s73 = sphi 0, %s72
      %s89 = sphi 0, %s73
      %s95 = sphi 0, %s97
      %s98 = sphi 0, %s95
      %s99 = sphi 0, %s98
      %s115 = sphi 0, %s99
    $region4: #{tpu_custom_call.1} parent=1 // loop_header_branch
      %20 = sbr.rel (%p18) target = $region8
    $region5: #{tpu_custom_call.1} parent=1 // loop_body
      %s22 = ssub.s32 %s17, 1
      %s23 = ssub.s32 %s17, 2
      %s30 = sadd.s32 1, %s25
      %p31 = scmp.ge.s32.totalorder %s30, 1
      %s32 = scalar_select %p31, 0, %s30
      %s33 = sadd.s32 1, %s24
      %s34 = scalar_select %p31, %s33, %s24
      %p35 = scmp.ge.s32.totalorder %s34, 2
      %s36 = scalar_select %p35, 0, %s34
      %s37 = sadd.s32 %s24, %s25
      %s38 = sadd.s32 %s36, %s32
      %s39 = ssub.s32 %s37, %s38
      %p40 = scmp.eq.s32.totalorder %s39, 0
      %s42 = sadd.s32 %s41, 1
      %s43 = scalar_select %p40, %s41, %s42
      %p46 = pneg %p40
      %p47 = scmp.eq.s32.totalorder %s17, 1
      %p48 = por %p46, %p47
      %p49 = scmp.ne.s32.totalorder %s41, %s44
      %p50 = scmp.eq.s32.totalorder %s17, 0
      %p51 = por %p49, %p50
      %p52 = scmp.ne.s32.totalorder %s41, %s44
      %p53 = scmp.eq.s32.totalorder %s22, 1
      %p54 = por %p52, %p53
      %p55 = scmp.ne.s32.totalorder %s44, %s45
      %p56 = scmp.eq.s32.totalorder %s22, 0
      %p57 = por %p55, %p56
      %p58 = scmp.ne.s32.totalorder %s44, %s45
      %p59 = scmp.eq.s32.totalorder %s23, 1
      %p60 = por %p58, %p59
      %p62 = scmp.ne.s32.totalorder %s45, %s61
      %p63 = scmp.eq.s32.totalorder %s23, 0
      %p64 = por %p62, %p63
      %s65 = sadd.s32 %s24, %s25
      %s66 = sadd.s32 %s36, %s32
      %s67 = ssub.s32 %s65, %s66
      %p68 = scmp.eq.s32.totalorder %s67, 0
      %s70 = sadd.s32 %s69, 1
      %s71 = scalar_select %p68, %s69, %s70
      %p74 = pneg %p68
      %p75 = scmp.eq.s32.totalorder %s17, 1
      %p76 = por %p74, %p75
      %p77 = scmp.ne.s32.totalorder %s69, %s72
      %p78 = scmp.eq.s32.totalorder %s17, 0
      %p79 = por %p77, %p78
      %p80 = scmp.ne.s32.totalorder %s69, %s72
      %p81 = scmp.eq.s32.totalorder %s22, 1
      %p82 = por %p80, %p81
      %p83 = scmp.ne.s32.totalorder %s72, %s73
      %p84 = scmp.eq.s32.totalorder %s22, 0
      %p85 = por %p83, %p84
      %p86 = scmp.ne.s32.totalorder %s72, %s73
      %p87 = scmp.eq.s32.totalorder %s23, 1
      %p88 = por %p86, %p87
      %p90 = scmp.ne.s32.totalorder %s73, %s89
      %p91 = scmp.eq.s32.totalorder %s23, 0
      %p92 = por %p90, %p91
      %s93 = ssub.s32 %s24, %s36
      %p94 = scmp.eq.s32.totalorder %s93, 0
      %s96 = sadd.s32 %s95, 1
      %s97 = scalar_select %p94, %s95, %s96
      %p100 = pneg %p94
      %p101 = scmp.eq.s32.totalorder %s17, 1
      %p102 = por %p100, %p101
      %p103 = scmp.ne.s32.totalorder %s95, %s98
      %p104 = scmp.eq.s32.totalorder %s17, 0
      %p105 = por %p103, %p104
      %p106 = scmp.ne.s32.totalorder %s95, %s98
      %p107 = scmp.eq.s32.totalorder %s22, 1
      %p108 = por %p106, %p107
      %p109 = scmp.ne.s32.totalorder %s98, %s99
      %p110 = scmp.eq.s32.totalorder %s22, 0
      %p111 = por %p109, %p110
      %p112 = scmp.ne.s32.totalorder %s98, %s99
      %p113 = scmp.eq.s32.totalorder %s23, 1
      %p114 = por %p112, %p113
      %p116 = scmp.ne.s32.totalorder %s99, %s115
      %p117 = scmp.eq.s32.totalorder %s23, 0
      %p118 = por %p116, %p117
      %p119 = scmp.le.s32.totalorder 1, %s17
      %p120 = scmp.lt.s32.totalorder %s17, 3
      %p121 = pnand %p119, %p120
      %p122 = pneg %p121
      // Predicated region
      $region9: #{tpu_custom_call.1} parent=5 // pred_check
        _
      $region10: #{tpu_custom_call.1} parent=5 // pred_check_branch
        %124 = sbr.rel (%p121) target = $region12
      $region11: #{tpu_custom_call.1} parent=5 // pred_region
        %s125 = ssub.s32 %s17, 1
      $region12: #{tpu_custom_call.1} parent=5 // pred_fallthru
        _
      %p126 = scmp.lt.s32.totalorder %s17, 2
      // Predicated region
      $region13: #{tpu_custom_call.1} parent=5 // pred_check
        %p127 = pneg %p126
      $region14: #{tpu_custom_call.1} parent=5 // pred_check_branch
        %129 = sbr.rel (%p127) target = $region16
      $region15: #{tpu_custom_call.1} parent=5 // pred_region
        // Predicated region
        $region17: #{tpu_custom_call.1} parent=15 // pred_check
          %p130 = pneg %p51
        $region18: #{tpu_custom_call.1} parent=15 // pred_check_branch
          %132 = sbr.rel (%p130) target = $region20
        $region19: #{tpu_custom_call.1} parent=15 // pred_region
          %s133 = sand.u32 %s41, 1
          %s134 = scalar_lea.sflag [#allocation3], %s133
          %s135 = sand.u32 %s41, 1
          %s136 = smul.addr %s135, 8
          %s137 = scalar_lea.vmem [#allocation2], %s136
          %s138 = sadd.s32 %s24, %s25
          %s140 = ssub.s32 128, 128
          %141 = vsyncadd %s134, %s140
          %s142 = smul.addr %s138, 128
          %s143 = scalar_lea.hbm %s0, %s142
          %s145 = sshll.u32 %s137, 4
          %s146 = int_to_ptr.vmem [resolvable:$true] %s145
          %148 = dma.hbm_to_vmem [thread:$0]  %s143, 128, %s146, %s134
        $region20: #{tpu_custom_call.1} parent=15 // pred_fallthru
          _
        // Predicated region
        $region21: #{tpu_custom_call.1} parent=15 // pred_check
          %p149 = pneg %p79
        $region22: #{tpu_custom_call.1} parent=15 // pred_check_branch
          %151 = sbr.rel (%p149) target = $region24
        $region23: #{tpu_custom_call.1} parent=15 // pred_region
          %s152 = sand.u32 %s69, 1
          %s153 = scalar_lea.sflag [#allocation6], %s152
          %s154 = sand.u32 %s69, 1
          %s155 = smul.addr %s154, 8
          %s156 = scalar_lea.vmem [#allocation5], %s155
          %s157 = sadd.s32 %s24, %s25
          %s159 = ssub.s32 128, 128
          %160 = vsyncadd %s153, %s159
          %s161 = smul.addr %s157, 128
          %s162 = scalar_lea.hbm %s1, %s161
          %s164 = sshll.u32 %s156, 4
          %s165 = int_to_ptr.vmem [resolvable:$true] %s164
          %167 = dma.hbm_to_vmem [thread:$0]  %s162, 128, %s165, %s153
        $region24: #{tpu_custom_call.1} parent=15 // pred_fallthru
          _
      $region16: #{tpu_custom_call.1} parent=5 // pred_fallthru
        _
      %p168 = scmp.le.s32.totalorder 1, %s17
      %p169 = scmp.lt.s32.totalorder %s17, 3
      %p170 = pnand %p168, %p169
      %p171 = pneg %p170
      // Predicated region
      $region25: #{tpu_custom_call.1} parent=5 // pred_check
        _
      $region26: #{tpu_custom_call.1} parent=5 // pred_check_branch
        %173 = sbr.rel (%p170) target = $region28
      $region27: #{tpu_custom_call.1} parent=5 // pred_region
        %s174 = ssub.s32 %s17, 1
        %s175 = sand.u32 %s44, 1
        %s176 = scalar_lea.sflag [#allocation3], %s175
        %s177 = sand.u32 %s44, 1
        %s178 = smul.addr %s177, 8
        %s179 = scalar_lea.vmem [#allocation2], %s178
        // Predicated region
        $region29: #{tpu_custom_call.1} parent=27 // pred_check
          %p180 = pneg %p57
        $region30: #{tpu_custom_call.1} parent=27 // pred_check_branch
          %182 = sbr.rel (%p180) target = $region32
        $region31: #{tpu_custom_call.1} parent=27 // pred_region
          %183 = dma.done %s176, 128
        $region32: #{tpu_custom_call.1} parent=27 // pred_fallthru
          _
        %s184 = sand.u32 %s72, 1
        %s185 = scalar_lea.sflag [#allocation6], %s184
        %s186 = sand.u32 %s72, 1
        %s187 = smul.addr %s186, 8
        %s188 = scalar_lea.vmem [#allocation5], %s187
        // Predicated region
        $region33: #{tpu_custom_call.1} parent=27 // pred_check
          %p189 = pneg %p85
        $region34: #{tpu_custom_call.1} parent=27 // pred_check_branch
          %191 = sbr.rel (%p189) target = $region36
        $region35: #{tpu_custom_call.1} parent=27 // pred_region
          %192 = dma.done %s185, 128
        $region36: #{tpu_custom_call.1} parent=27 // pred_fallthru
          _
        %s193 = sand.u32 %s44, 1
        %s194 = scalar_lea.sflag [#allocation3], %s193
        %s195 = sand.u32 %s44, 1
        %s196 = smul.addr %s195, 8
        %s197 = scalar_lea.vmem [#allocation2], %s196
        %p198 = pneg %p57
        %p199 = pneg %p54
        %s200 = sand.u32 %s72, 1
        %s201 = scalar_lea.sflag [#allocation6], %s200
        %s202 = sand.u32 %s72, 1
        %s203 = smul.addr %s202, 8
        %s204 = scalar_lea.vmem [#allocation5], %s203
        %p205 = pneg %p85
        %p206 = pneg %p82
        %p207 = pneg %p111
        %p208 = pneg %p108
        %s209 = sand.u32 %s98, 1
        %s210 = scalar_lea.sflag [#allocation4], %s209
        %s211 = sand.u32 %s98, 1
        %s212 = smul.addr %s211, 32
        %s213 = scalar_lea.vmem [#allocation7], %s212
        %s214 = sadd.s32 %s26, %s27
        %s215 = sadd.s32 %s26, %s27
        %p216 = scmp.eq.s32.totalorder %s27, 0
        // Predicated region
        $region37: #{tpu_custom_call.1} parent=27 // pred_check
          %p217 = pneg %p216
        $region38: #{tpu_custom_call.1} parent=27 // pred_check_branch
          %219 = sbr.rel (%p217) target = $region40
        $region39: #{tpu_custom_call.1} parent=27 // pred_region
          %220 = vst [vmem:[%s213] sm:$0xff] 0.0
          %221 = vst [vmem:[%s213 + $0x8] sm:$0xff] 0.0
          %222 = vst [vmem:[%s213 + $0x10] sm:$0xff] 0.0
          %223 = vst [vmem:[%s213 + $0x18] sm:$0xff] 0.0
        $region40: #{tpu_custom_call.1} parent=27 // pred_fallthru
          _
        %v224 = vld [vmem:[%s179] sm:$0xff]
        %v225 = vld [vmem:[%s188] sm:$0xff]
        %s226 = sadd.s32 %s26, %s27
        %s227 = smul.u32 %s226, 8
        %v228 = vlaneseq
        %v229 = vshrl.u32 %v228, 7
        %v230 = vlaneseq
        %v231 = vand.u32 %v230, 127
        %v232 = vstv %s227
        %v233 = vadd.s32 %v232, %v229
        %v234 = vmul.u32 %v233, 128
        %v235 = vadd.s32 %v234, %v231
        %vm236 = vcmp.lt.s32.totalorder %v235, 2048
        %v237 = vand.u32 2147483647, %v224
        %v238 = vsub.f32 0.0, %v237
        %v239 = vmul.f32 %v238, 1.442695
        %v240 = vpow.pop %v239
        %v241 = vadd.f32 %v240, 1.0
        %v242 = vrcp.pop %v241
        %vm243 = vcmp.ge.f32.partialorder %v224, 0.0
        %v244 = vmul.f32 %v240, %v242
        %v245 = vsel %vm243, %v242, %v244
        %v246 = vmax.f32 %v224, 0.0
        %v247 = vmul.f32 %v224, %v225
        %v248 = vsub.f32 %v246, %v247
        %v249 = vadd.f32 %v240, 1.0
        %v250 = vlog2.pop %v249
        %v251 = vmul.f32 %v250, 0.6931472
        %v252 = vmul.f32 -0.5, %v240
        %v253 = vadd.f32 %v252, 1.0
        %v254 = vmul.f32 %v253, %v240
        %v255 = vand.u32 2147483647, %v240
        %vm256 = vcmp.lt.f32.partialorder %v255, 0.0004427343
        %v257 = vsel %vm256, %v254, %v251
        %v258 = vadd.f32 %v248, %v257
        %v259 = vmul.f32 %v245, %v225
        %v260 = vsel %vm236, %v259, 0.0
        %v261 = vsel %vm236, %v245, 0.0
        %v262 = vsel %vm236, %v225, 0.0
        %v263 = vsel %vm236, %v258, 0.0
        %v264 = vld [vmem:[%s213] sm:$0xff]
        %v265 = vadd.f32 %v260, 0.0
        %v266 = vadd.f32 %v264, %v265
        %267 = vst [vmem:[%s213] sm:$0xff] %v266
        %s268 = scalar_lea.vmem %s213, 8 [#allocation7]
        %v269 = vld [vmem:[%s268] sm:$0xff]
        %v270 = vadd.f32 %v261, 0.0
        %v271 = vadd.f32 %v269, %v270
        %272 = vst [vmem:[%s268] sm:$0xff] %v271
        %s273 = scalar_lea.vmem %s213, 16 [#allocation7]
        %v274 = vld [vmem:[%s273] sm:$0xff]
        %v275 = vadd.f32 %v262, 0.0
        %v276 = vadd.f32 %v274, %v275
        %277 = vst [vmem:[%s273] sm:$0xff] %v276
        %s278 = scalar_lea.vmem %s213, 24 [#allocation7]
        %v279 = vld [vmem:[%s278] sm:$0xff]
        %v280 = vadd.f32 %v263, 0.0
        %v281 = vadd.f32 %v279, %v280
        %282 = vst [vmem:[%s278] sm:$0xff] %v281
        %s283 = sand.u32 %s98, 1
        %s284 = scalar_lea.sflag [#allocation4], %s283
        %s285 = sand.u32 %s98, 1
        %s286 = smul.addr %s285, 32
        %s287 = scalar_lea.vmem [#allocation7], %s286
        // Predicated region
        $region41: #{tpu_custom_call.1} parent=27 // pred_check
          %p288 = pneg %p108
        $region42: #{tpu_custom_call.1} parent=27 // pred_check_branch
          %290 = sbr.rel (%p288) target = $region44
        $region43: #{tpu_custom_call.1} parent=27 // pred_region
          %s292 = ssub.s32 512, 512
          %293 = vsyncadd %s284, %s292
          %s294 = smul.addr %s26, 4
          %s295 = smul.addr %s294, 128
          %s296 = scalar_lea.hbm %s2, %s295
          %s297 = sshll.u32 %s287, 4
          %s298 = int_to_ptr.vmem [resolvable:$true] %s297
          %303 = dma.vmem_to_hbm [thread:$0]  %s298, 512, %s296, %s284, 128, 128, 8
        $region44: #{tpu_custom_call.1} parent=27 // pred_fallthru
          _
      $region28: #{tpu_custom_call.1} parent=5 // pred_fallthru
        _
      %p304 = scmp.le.s32.totalorder 2, %s17
      // Predicated region
      $region45: #{tpu_custom_call.1} parent=5 // pred_check
        %p305 = pneg %p304
      $region46: #{tpu_custom_call.1} parent=5 // pred_check_branch
        %307 = sbr.rel (%p305) target = $region48
      $region47: #{tpu_custom_call.1} parent=5 // pred_region
        %s308 = ssub.s32 %s17, 2
        // Predicated region
        $region49: #{tpu_custom_call.1} parent=47 // pred_check
          %p309 = pneg %p114
        $region50: #{tpu_custom_call.1} parent=47 // pred_check_branch
          %311 = sbr.rel (%p309) target = $region52
        $region51: #{tpu_custom_call.1} parent=47 // pred_region
          %s312 = sand.u32 %s99, 1
          %s313 = scalar_lea.sflag [#allocation4], %s312
          %s314 = sand.u32 %s99, 1
          %s315 = smul.addr %s314, 32
          %s316 = scalar_lea.vmem [#allocation7], %s315
          %317 = dma.done %s313, 512
        $region52: #{tpu_custom_call.1} parent=47 // pred_fallthru
          _
      $region48: #{tpu_custom_call.1} parent=5 // pred_fallthru
        _
    $region6: #{tpu_custom_call.1} parent=1 // loop_footer
      %s21 = sadd.s32 1, %s17
    $region7: #{tpu_custom_call.1} parent=1 // loop_footer_branch
      %16 = sbr.rel target = $region3
    $region8: #{tpu_custom_call.1} parent=1 // loop_exit
      _
    %318 = vsyncpa [#allocation3], 1
    %s319 = scalar_lea.sflag [#allocation3], 1
    %320 = vsyncpa %s319, 1
    %321 = vsyncpa [#allocation6], 1
    %s322 = scalar_lea.sflag [#allocation6], 1
    %323 = vsyncpa %s322, 1
    %324 = vsyncpa [#allocation4], 1
    %s325 = scalar_lea.sflag [#allocation4], 1
    %326 = vsyncpa %s325, 1

</llo_original>
